<compile_context>
chip_gen: v7x
topology: tpu7x:2x2x1
jax: 0.10.0
libtpu: 0.0.40
codegen_flags: <defaults>
</compile_context>

<pallas_src>
import functools

import jax
import jax.numpy as jnp
from jax.experimental import pallas as pl
from jax.experimental.pallas import tpu as pltpu

HIDDEN = 24
OUT_PAD = 128   # lane-dense width for the final layer's output store
SUBLANE = 8     # pad batch to a multiple of this


def dqn_kernel(x_ref, w1_ref, b1_ref, w2_ref, b2_ref, w3_ref, b3_ref, o_ref,
               *, compute_dtype):
    # Matmul operands in compute_dtype (f32 by default; bf16 on v6e/v7x),
    # f32 accumulation on the MXU, bias-add + ReLU in f32 on the VPU.
    x = x_ref[...].astype(compute_dtype)

    # Layer 1: Linear + ReLU
    h1 = jnp.dot(x, w1_ref[...].astype(compute_dtype),
                 preferred_element_type=jnp.float32) + b1_ref[...]
    h1 = jnp.maximum(h1, 0.0)

    # Layer 2: Linear + ReLU
    h2 = jnp.dot(h1.astype(compute_dtype), w2_ref[...].astype(compute_dtype),
                 preferred_element_type=jnp.float32) + b2_ref[...]
    h2 = jnp.maximum(h2, 0.0)

    # Layer 3: Linear (Q-values, no activation). Output is [B_pad, 128]:
    # lane-dense, unmasked store; junk columns are sliced away in the wrapper.
    q = jnp.dot(h2.astype(compute_dtype), w3_ref[...].astype(compute_dtype),
                preferred_element_type=jnp.float32) + b3_ref[...]
    o_ref[...] = q.astype(o_ref.dtype)


def dqn_forward(x, params, compute_dtype=jnp.float32):
    """x: [B, state_dim] f32; params from init_dqn_params.

    Returns [B, action_dim] f32 Q-values.
    """
    B, state_dim = x.shape
    action_dim = int(params["action_dim"])

    # Pad batch to a sublane multiple so every vreg on the batch axis is full.
    B_pad = ((B + SUBLANE - 1) // SUBLANE) * SUBLANE
    if B_pad != B:
        x = jnp.pad(x, ((0, B_pad - B), (0, 0)))

    flops = 2 * B_pad * (state_dim * HIDDEN + HIDDEN * HIDDEN + HIDDEN * OUT_PAD)
    bytes_accessed = 4 * (
        x.size
        + params["w1"].size + params["b1"].size
        + params["w2"].size + params["b2"].size
        + params["w3"].size + params["b3"].size
        + B_pad * OUT_PAD)

    vmem = pl.BlockSpec(memory_space=pltpu.MemorySpace.VMEM)
    kernel = functools.partial(dqn_kernel, compute_dtype=compute_dtype)

    q_pad = pl.pallas_call(
        kernel,
        out_shape=jax.ShapeDtypeStruct((B_pad, OUT_PAD), jnp.float32),
        in_specs=[vmem] * 7,
        out_specs=vmem,
        cost_estimate=pl.CostEstimate(
            flops=flops, transcendentals=0, bytes_accessed=bytes_accessed),
    )(x, params["w1"], params["b1"], params["w2"], params["b2"],
      params["w3"], params["b3"])

    return q_pad[:B, :action_dim]


def init_dqn_params(key, state_dim, action_dim, hidden=HIDDEN):
    """Deterministic init mimicking PyTorch nn.Linear default U(-1/sqrt(fan_in), ...)."""
    def linear_init(k, fan_in, fan_out):
        kw, kb = jax.random.split(k)
        bound = 1.0 / jnp.sqrt(jnp.float32(fan_in))
        # stored as [in, out] so the kernel does x @ W
        w = jax.random.uniform(kw, (fan_in, fan_out), jnp.float32, -bound, bound)
        b = jax.random.uniform(kb, (1, fan_out), jnp.float32, -bound, bound)
        return w, b

    k1, k2, k3 = jax.random.split(key, 3)
    w1, b1 = linear_init(k1, state_dim, hidden)
    w2, b2 = linear_init(k2, hidden, hidden)
    w3, b3 = linear_init(k3, hidden, action_dim)

    # Zero-pad the last layer to OUT_PAD lanes so the kernel's output store is
    # lane-dense; the wrapper slices the real action columns back out.
    w3p = jnp.zeros((hidden, OUT_PAD), jnp.float32).at[:, :action_dim].set(w3)
    b3p = jnp.zeros((1, OUT_PAD), jnp.float32).at[:, :action_dim].set(b3)

    return {"w1": w1, "b1": b1, "w2": w2, "b2": b2, "w3": w3p, "b3": b3p,
            "action_dim": action_dim}


def dqn_reference(x, p):
    a = int(p["action_dim"])
    h1 = jnp.maximum(x @ p["w1"] + p["b1"], 0.0)
    h2 = jnp.maximum(h1 @ p["w2"] + p["b2"], 0.0)
    q = h2 @ p["w3"] + p["b3"]
    return q[:, :a]


if __name__ == "__main__":
    key = jax.random.PRNGKey(0)
    k_params, k_x1, k_x2 = jax.random.split(key, 3)

    state_dim, action_dim = 4, 2  # CartPole-like dims
    params = init_dqn_params(k_params, state_dim, action_dim)

    # f32 path, sublane-aligned batch.
    x = jax.random.normal(k_x1, (8, state_dim), dtype=jnp.float32)
    q = jax.block_until_ready(dqn_forward(x, params))
    q_ref = dqn_reference(x, params)
    assert q.shape == (8, action_dim)
    assert jnp.allclose(q, q_ref, atol=1e-5, rtol=1e-5)

    # bf16-MXU path (v6e/v7x) + ragged batch (exercises the batch padding).
    x2 = jax.random.normal(k_x2, (5, state_dim), dtype=jnp.float32)
    q2 = jax.block_until_ready(dqn_forward(x2, params, compute_dtype=jnp.bfloat16))
    q2_ref = dqn_reference(x2, params)
    assert q2.shape == (5, action_dim)
    assert jnp.allclose(q2, q2_ref, atol=5e-2, rtol=5e-2)

    print("KERNEL_OK")
</pallas_src>

<mosaic_0001>
module attributes {stable_mosaic.version = 11 : i64} {
  func.func @dqn_kernel(%arg0: memref<8x4xf32, #tpu.memory_space<vmem>>, %arg1: memref<4x24xf32, #tpu.memory_space<vmem>>, %arg2: memref<1x24xf32, #tpu.memory_space<vmem>>, %arg3: memref<24x24xf32, #tpu.memory_space<vmem>>, %arg4: memref<1x24xf32, #tpu.memory_space<vmem>>, %arg5: memref<24x128xf32, #tpu.memory_space<vmem>>, %arg6: memref<1x128xf32, #tpu.memory_space<vmem>>, %arg7: memref<8x128xf32, #tpu.memory_space<vmem>>) attributes {dimension_semantics = [], scalar_prefetch = 0 : i64, scratch_operands = 0 : i64, tpu.core_type = #tpu.core_type<tc>} {
    %c0 = arith.constant 0 : index
    %c0_0 = arith.constant 0 : index
    %0 = vector.load %arg0[%c0, %c0_0] : memref<8x4xf32, #tpu.memory_space<vmem>>, vector<8x4xf32>
    %c0_1 = arith.constant 0 : index
    %c0_2 = arith.constant 0 : index
    %1 = vector.load %arg1[%c0_1, %c0_2] : memref<4x24xf32, #tpu.memory_space<vmem>>, vector<4x24xf32>
    %cst = arith.constant dense<0.000000e+00> : vector<8x24xf32>
    %2 = tpu.matmul %0, %1, %cst {dimension_numbers = #tpu.dot_dimension_numbers<[1], [0], [0], [1], [0, 0, 1, 1], [], []>} : vector<8x4xf32>, vector<4x24xf32>, vector<8x24xf32> -> vector<8x24xf32>
    %c0_3 = arith.constant 0 : index
    %c0_4 = arith.constant 0 : index
    %3 = vector.load %arg2[%c0_3, %c0_4] : memref<1x24xf32, #tpu.memory_space<vmem>>, vector<1x24xf32>
    %4 = vector.broadcast %3 : vector<1x24xf32> to vector<8x24xf32>
    %5 = arith.addf %2, %4 : vector<8x24xf32>
    %cst_5 = arith.constant 0.000000e+00 : f32
    %6 = vector.broadcast %cst_5 : f32 to vector<8x24xf32>
    %7 = arith.maximumf %5, %6 : vector<8x24xf32>
    %c0_6 = arith.constant 0 : index
    %c0_7 = arith.constant 0 : index
    %8 = vector.load %arg3[%c0_6, %c0_7] : memref<24x24xf32, #tpu.memory_space<vmem>>, vector<24x24xf32>
    %cst_8 = arith.constant dense<0.000000e+00> : vector<8x24xf32>
    %9 = tpu.matmul %7, %8, %cst_8 {dimension_numbers = #tpu.dot_dimension_numbers<[1], [0], [0], [1], [0, 0, 1, 1], [], []>} : vector<8x24xf32>, vector<24x24xf32>, vector<8x24xf32> -> vector<8x24xf32>
    %c0_9 = arith.constant 0 : index
    %c0_10 = arith.constant 0 : index
    %10 = vector.load %arg4[%c0_9, %c0_10] : memref<1x24xf32, #tpu.memory_space<vmem>>, vector<1x24xf32>
    %11 = vector.broadcast %10 : vector<1x24xf32> to vector<8x24xf32>
    %12 = arith.addf %9, %11 : vector<8x24xf32>
    %cst_11 = arith.constant 0.000000e+00 : f32
    %13 = vector.broadcast %cst_11 : f32 to vector<8x24xf32>
    %14 = arith.maximumf %12, %13 : vector<8x24xf32>
    %c0_12 = arith.constant 0 : index
    %c0_13 = arith.constant 0 : index
    %15 = vector.load %arg5[%c0_12, %c0_13] : memref<24x128xf32, #tpu.memory_space<vmem>>, vector<24x128xf32>
    %cst_14 = arith.constant dense<0.000000e+00> : vector<8x128xf32>
    %16 = tpu.matmul %14, %15, %cst_14 {dimension_numbers = #tpu.dot_dimension_numbers<[1], [0], [0], [1], [0, 0, 1, 1], [], []>} : vector<8x24xf32>, vector<24x128xf32>, vector<8x128xf32> -> vector<8x128xf32>
    %c0_15 = arith.constant 0 : index
    %c0_16 = arith.constant 0 : index
    %17 = vector.load %arg6[%c0_15, %c0_16] : memref<1x128xf32, #tpu.memory_space<vmem>>, vector<1x128xf32>
    %18 = vector.broadcast %17 : vector<1x128xf32> to vector<8x128xf32>
    %19 = arith.addf %16, %18 : vector<8x128xf32>
    %c0_17 = arith.constant 0 : index
    %c0_18 = arith.constant 0 : index
    %20 = vector.load %arg7[%c0_17, %c0_18] : memref<8x128xf32, #tpu.memory_space<vmem>>, vector<8x128xf32>
    tpu.vector_store %arg7[%c0_17, %c0_18], %19 {strides = array<i32>} : memref<8x128xf32, #tpu.memory_space<vmem>>, vector<8x128xf32>,
    return
  }
}

</mosaic_0001>

<llo_original>
// kernel: tpu_custom_call.1
$region0: #{tpu_custom_call.1}
  #allocation0 [shape = 'u32[]', space=smem, size = 0x4, offset = 0x4, fixed_abs, tag = 'smem constant byte address 0x4 - core index']
  #allocation1 [shape = 'u32[144,128]{1,0:T(1,128)}', space=vmem, size = 0x12000, scoped, tag = 'internal scratch']
  %s0 = inlined_call_operand.vmem [shape: f32[8,4], index: 0, kind: input, shape index: {}]
  %s1 = inlined_call_operand.vmem [shape: f32[4,24], index: 1, kind: input, shape index: {}]
  %s2 = inlined_call_operand.vmem [shape: f32[1,24], index: 2, kind: input, shape index: {}]
  %s3 = inlined_call_operand.hbm [shape: f32[24,24], index: 3, kind: input, shape index: {}]
  %s4 = inlined_call_operand.vmem [shape: f32[1,24], index: 4, kind: input, shape index: {}]
  %s5 = inlined_call_operand.vmem [shape: f32[24,128], index: 5, kind: input, shape index: {}]
  %s6 = inlined_call_operand.vmem [shape: f32[1,128], index: 6, kind: input, shape index: {}]
  %s7 = inlined_call_operand.hbm [shape: f32[8,128], index: 7, kind: output, shape index: {}]
  %s8 = sld [smem:[#allocation0]]
  $region42: #{tpu_custom_call.1} parent=0
    _
  %s10 = ssub.s32 1, %s8
  %s11 = scalar_select 0, %s10, %s8
  $region1: #{tpu_custom_call.1} parent=0
    #allocation2 [shape = 'u8[12288]{0}', space=vmem, size = 0x3000, scoped, tag = 'input window, operand 3, single buffered']
    #allocation3 [shape = 's32[1]{0}', space=sflag, size = 0x4, scoped, tag = 'scoped memory for tpu_custom_call.1']
    #allocation4 [shape = 's32[1]{0}', space=sflag, size = 0x4, scoped, tag = 'scoped memory for tpu_custom_call.1']
    #allocation5 [shape = 'u8[4096]{0}', space=vmem, size = 0x1000, scoped, tag = 'output window, operand 0, single buffered']
    %12 = vsyncpa [#allocation3], 0
    %13 = vsyncpa [#allocation4], 0
    // Predicated region
    $region2: #{tpu_custom_call.1} parent=1 // pred_check
      _
    $region3: #{tpu_custom_call.1} parent=1 // pred_check_branch
      %15 = sbr.rel (0) target = $region5
    $region4: #{tpu_custom_call.1} parent=1 // pred_region
      _
    $region5: #{tpu_custom_call.1} parent=1 // pred_fallthru
      _
    // Predicated region
    $region6: #{tpu_custom_call.1} parent=1 // pred_check
      _
    $region7: #{tpu_custom_call.1} parent=1 // pred_check_branch
      %17 = sbr.rel (0) target = $region9
    $region8: #{tpu_custom_call.1} parent=1 // pred_region
      _
    $region9: #{tpu_custom_call.1} parent=1 // pred_fallthru
      _
    // Predicated region
    $region10: #{tpu_custom_call.1} parent=1 // pred_check
      _
    $region11: #{tpu_custom_call.1} parent=1 // pred_check_branch
      %19 = sbr.rel (0) target = $region13
    $region12: #{tpu_custom_call.1} parent=1 // pred_region
      _
    $region13: #{tpu_custom_call.1} parent=1 // pred_fallthru
      _
    // Predicated region
    $region14: #{tpu_custom_call.1} parent=1 // pred_check
      _
    $region15: #{tpu_custom_call.1} parent=1 // pred_check_branch
      %21 = sbr.rel (0) target = $region17
    $region16: #{tpu_custom_call.1} parent=1 // pred_region
      %s23 = ssub.s32 384, 384
      %24 = vsyncadd [#allocation3], %s23
      %s25 = sshll.u32 [#allocation2], 4
      %s26 = int_to_ptr.vmem [resolvable:$true] %s25
      %31 = dma.hbm_to_vmem [thread:$0]  %s3, 384, %s26, [#allocation3], 128, 128, 8
    $region17: #{tpu_custom_call.1} parent=1 // pred_fallthru
      _
    // Predicated region
    $region18: #{tpu_custom_call.1} parent=1 // pred_check
      _
    $region19: #{tpu_custom_call.1} parent=1 // pred_check_branch
      %33 = sbr.rel (0) target = $region21
    $region20: #{tpu_custom_call.1} parent=1 // pred_region
      _
    $region21: #{tpu_custom_call.1} parent=1 // pred_fallthru
      _
    // Predicated region
    $region22: #{tpu_custom_call.1} parent=1 // pred_check
      _
    $region23: #{tpu_custom_call.1} parent=1 // pred_check_branch
      %35 = sbr.rel (0) target = $region25
    $region24: #{tpu_custom_call.1} parent=1 // pred_region
      _
    $region25: #{tpu_custom_call.1} parent=1 // pred_fallthru
      _
    // Predicated region
    $region26: #{tpu_custom_call.1} parent=1 // pred_check
      _
    $region27: #{tpu_custom_call.1} parent=1 // pred_check_branch
      %37 = sbr.rel (0) target = $region29
    $region28: #{tpu_custom_call.1} parent=1 // pred_region
      _
    $region29: #{tpu_custom_call.1} parent=1 // pred_fallthru
      _
    // Predicated region
    $region30: #{tpu_custom_call.1} parent=1 // pred_check
      _
    $region31: #{tpu_custom_call.1} parent=1 // pred_check_branch
      %39 = sbr.rel (0) target = $region33
    $region32: #{tpu_custom_call.1} parent=1 // pred_region
      %40 = dma.done [#allocation3], 384
    $region33: #{tpu_custom_call.1} parent=1 // pred_fallthru
      _
    %v41 = vld [vmem:[%s0] sm:$0xff]
    %v42 = vld [vmem:[%s1] sm:$0xf]
    %v43 = vld [vmem:[%s2] sm:$0x1]
    %v45 = vlaneseq
    %v46 = vshrl.u32 %v45, 7
    %v47 = vsub.s32 0, %v46
    %v48 = vrot.slane %v43, %v47
    %vm50 = vcmask 31744
    %v52 = vsel %vm50, %v41, 0
    %vm54 = vcmask 1043456
    %v56 = vsel %vm54, %v42, 0
    %58 = vmatprep.subr.mxu0 0.0
    %59 = vmatpush1.msra.mxu0 %v56
    %60 = vmatprep.subr.mxu0 0.0
    %61 = vmatpush1.msra.mxu0 0.0
    %62 = vmatprep.subr.mxu0 0.0
    %63 = vmatpush1.msra.mxu0 0.0
    %64 = vmatprep.subr.mxu0 0.0
    %65 = vmatpush1.msra.mxu0 0.0
    %66 = vmatprep.subr.mxu0 0.0
    %67 = vmatpush1.msra.mxu0 0.0
    %68 = vmatprep.subr.mxu0 0.0
    %69 = vmatpush1.msra.mxu0 0.0
    %70 = vmatprep.subr.mxu0 0.0
    %71 = vmatpush1.msra.mxu0 0.0
    %72 = vmatprep.subr.mxu0 0.0
    %73 = vmatpush1.msra.mxu0 0.0
    %74 = vmatprep.subr.mxu0 0.0
    %75 = vmatpush1.msra.mxu0 0.0
    %76 = vmatprep.subr.mxu0 0.0
    %77 = vmatpush1.msra.mxu0 0.0
    %78 = vmatprep.subr.mxu0 0.0
    %79 = vmatpush1.msra.mxu0 0.0
    %80 = vmatprep.subr.mxu0 0.0
    %81 = vmatpush1.msra.mxu0 0.0
    %82 = vmatprep.subr.mxu0 0.0
    %83 = vmatpush1.msra.mxu0 0.0
    %84 = vmatprep.subr.mxu0 0.0
    %85 = vmatpush1.msra.mxu0 0.0
    %86 = vmatprep.subr.mxu0 0.0
    %87 = vmatpush1.msra.mxu0 0.0
    %88 = vmatprep.subr.mxu0 0.0
    %89 = vmatpush1.msra.mxu0 0.0
    %90 = vmatprep.subr.mxu0 0.0
    %91 = vmatpush1.msra.mxu0 0.0
    %92 = vmatprep.subr.mxu0 0.0
    %93 = vmatpush1.msra.mxu0 0.0
    %94 = vmatprep.subr.mxu0 0.0
    %95 = vmatpush1.msra.mxu0 0.0
    %96 = vmatprep.subr.mxu0 0.0
    %97 = vmatpush1.msra.mxu0 0.0
    %98 = vmatprep.subr.mxu0 0.0
    %99 = vmatpush1.msra.mxu0 0.0
    %100 = vmatprep.subr.mxu0 0.0
    %101 = vmatpush1.msra.mxu0 0.0
    %102 = vmatprep.subr.mxu0 0.0
    %103 = vmatpush1.msra.mxu0 0.0
    %104 = vmatprep.subr.mxu0 0.0
    %105 = vmatpush1.msra.mxu0 0.0
    %106 = vmatprep.subr.mxu0 0.0
    %107 = vmatpush1.msra.mxu0 0.0
    %108 = vmatprep.subr.mxu0 0.0
    %109 = vmatpush1.msra.mxu0 0.0
    %110 = vmatprep.subr.mxu0 0.0
    %111 = vmatpush1.msra.mxu0 0.0
    %112 = vmatprep.subr.mxu0 0.0
    %113 = vmatpush1.msra.mxu0 0.0
    %114 = vmatprep.subr.mxu0 0.0
    %115 = vmatpush1.msra.mxu0 0.0
    %116 = vmatprep.subr.mxu0 0.0
    %117 = vmatpush1.msra.mxu0 0.0
    %118 = vmatprep.subr.mxu0 0.0
    %119 = vmatpush1.msra.mxu0 0.0
    %120 = vmatprep.subr.mxu0 0.0
    %121 = vmatpush1.msra.mxu0 0.0
    %122 = vmatprep.mubr.f32.mxu0 0.0
    %123 = vmatmul.mubr.f32.gmra.mrb[0].mxu0 %v52
    %v124 = vpop.f32.mrb[0].mxu0
    %v125 = vadd.f32 %v48, %v124
    %v126 = vpop.f32.mrb[0].mxu0
    %127 = vdwg.mxu0
    %v128 = vmax.f32 %v125, 0.0
    %v129 = vld [vmem:[#allocation2] sm:$0xff]
    %v130 = vld [vmem:[#allocation2 + $0x8] sm:$0xff]
    %v131 = vld [vmem:[#allocation2 + $0x10] sm:$0xff]
    %v132 = vld [vmem:[%s4] sm:$0x1]
    %v134 = vlaneseq
    %v135 = vshrl.u32 %v134, 7
    %v136 = vsub.s32 0, %v135
    %v137 = vrot.slane %v132, %v136
    %vm139 = vcmask 195584
    %v141 = vsel %vm139, %v128, 0
    %143 = vmatprep.subr.mxu0 0.0
    %144 = vmatpush1.msra.mxu0 %v129
    %145 = vmatprep.subr.mxu0 0.0
    %146 = vmatpush1.msra.mxu0 %v130
    %147 = vmatprep.subr.mxu0 0.0
    %148 = vmatpush1.msra.mxu0 %v131
    %149 = vmatprep.subr.mxu0 0.0
    %150 = vmatpush1.msra.mxu0 0.0
    %151 = vmatprep.subr.mxu0 0.0
    %152 = vmatpush1.msra.mxu0 0.0
    %153 = vmatprep.subr.mxu0 0.0
    %154 = vmatpush1.msra.mxu0 0.0
    %155 = vmatprep.subr.mxu0 0.0
    %156 = vmatpush1.msra.mxu0 0.0
    %157 = vmatprep.subr.mxu0 0.0
    %158 = vmatpush1.msra.mxu0 0.0
    %159 = vmatprep.subr.mxu0 0.0
    %160 = vmatpush1.msra.mxu0 0.0
    %161 = vmatprep.subr.mxu0 0.0
    %162 = vmatpush1.msra.mxu0 0.0
    %163 = vmatprep.subr.mxu0 0.0
    %164 = vmatpush1.msra.mxu0 0.0
    %165 = vmatprep.subr.mxu0 0.0
    %166 = vmatpush1.msra.mxu0 0.0
    %167 = vmatprep.subr.mxu0 0.0
    %168 = vmatpush1.msra.mxu0 0.0
    %169 = vmatprep.subr.mxu0 0.0
    %170 = vmatpush1.msra.mxu0 0.0
    %171 = vmatprep.subr.mxu0 0.0
    %172 = vmatpush1.msra.mxu0 0.0
    %173 = vmatprep.subr.mxu0 0.0
    %174 = vmatpush1.msra.mxu0 0.0
    %175 = vmatprep.subr.mxu0 0.0
    %176 = vmatpush1.msra.mxu0 0.0
    %177 = vmatprep.subr.mxu0 0.0
    %178 = vmatpush1.msra.mxu0 0.0
    %179 = vmatprep.subr.mxu0 0.0
    %180 = vmatpush1.msra.mxu0 0.0
    %181 = vmatprep.subr.mxu0 0.0
    %182 = vmatpush1.msra.mxu0 0.0
    %183 = vmatprep.subr.mxu0 0.0
    %184 = vmatpush1.msra.mxu0 0.0
    %185 = vmatprep.subr.mxu0 0.0
    %186 = vmatpush1.msra.mxu0 0.0
    %187 = vmatprep.subr.mxu0 0.0
    %188 = vmatpush1.msra.mxu0 0.0
    %189 = vmatprep.subr.mxu0 0.0
    %190 = vmatpush1.msra.mxu0 0.0
    %191 = vmatprep.subr.mxu0 0.0
    %192 = vmatpush1.msra.mxu0 0.0
    %193 = vmatprep.subr.mxu0 0.0
    %194 = vmatpush1.msra.mxu0 0.0
    %195 = vmatprep.subr.mxu0 0.0
    %196 = vmatpush1.msra.mxu0 0.0
    %197 = vmatprep.subr.mxu0 0.0
    %198 = vmatpush1.msra.mxu0 0.0
    %199 = vmatprep.subr.mxu0 0.0
    %200 = vmatpush1.msra.mxu0 0.0
    %201 = vmatprep.subr.mxu0 0.0
    %202 = vmatpush1.msra.mxu0 0.0
    %203 = vmatprep.subr.mxu0 0.0
    %204 = vmatpush1.msra.mxu0 0.0
    %205 = vmatprep.subr.mxu0 0.0
    %206 = vmatpush1.msra.mxu0 0.0
    %207 = vmatprep.mubr.f32.mxu0 0.0
    %208 = vmatmul.mubr.f32.gmra.mrb[0].mxu0 %v141
    %v209 = vpop.f32.mrb[0].mxu0
    %v210 = vadd.f32 %v137, %v209
    %v211 = vpop.f32.mrb[0].mxu0
    %212 = vdwg.mxu0
    %v213 = vmax.f32 %v210, 0.0
    %v214 = vld [vmem:[%s5] sm:$0xff]
    %v215 = vld [vmem:[%s5 + $0x8] sm:$0xff]
    %v216 = vld [vmem:[%s5 + $0x10] sm:$0xff]
    %v217 = vld [vmem:[%s6] sm:$0x1]
    %v219 = vlaneseq
    %v220 = vshrl.u32 %v219, 7
    %v221 = vsub.s32 0, %v220
    %v222 = vrot.slane %v217, %v221
    %v225 = vsel %vm139, %v213, 0
    %227 = vmatprep.subr.mxu0 0.0
    %228 = vmatpush1.msra.mxu0 %v214
    %229 = vmatprep.subr.mxu0 0.0
    %230 = vmatpush1.msra.mxu0 %v215
    %231 = vmatprep.subr.mxu0 0.0
    %232 = vmatpush1.msra.mxu0 %v216
    %233 = vmatprep.subr.mxu0 0.0
    %234 = vmatpush1.msra.mxu0 0.0
    %235 = vmatprep.subr.mxu0 0.0
    %236 = vmatpush1.msra.mxu0 0.0
    %237 = vmatprep.subr.mxu0 0.0
    %238 = vmatpush1.msra.mxu0 0.0
    %239 = vmatprep.subr.mxu0 0.0
    %240 = vmatpush1.msra.mxu0 0.0
    %241 = vmatprep.subr.mxu0 0.0
    %242 = vmatpush1.msra.mxu0 0.0
    %243 = vmatprep.subr.mxu0 0.0
    %244 = vmatpush1.msra.mxu0 0.0
    %245 = vmatprep.subr.mxu0 0.0
    %246 = vmatpush1.msra.mxu0 0.0
    %247 = vmatprep.subr.mxu0 0.0
    %248 = vmatpush1.msra.mxu0 0.0
    %249 = vmatprep.subr.mxu0 0.0
    %250 = vmatpush1.msra.mxu0 0.0
    %251 = vmatprep.subr.mxu0 0.0
    %252 = vmatpush1.msra.mxu0 0.0
    %253 = vmatprep.subr.mxu0 0.0
    %254 = vmatpush1.msra.mxu0 0.0
    %255 = vmatprep.subr.mxu0 0.0
    %256 = vmatpush1.msra.mxu0 0.0
    %257 = vmatprep.subr.mxu0 0.0
    %258 = vmatpush1.msra.mxu0 0.0
    %259 = vmatprep.subr.mxu0 0.0
    %260 = vmatpush1.msra.mxu0 0.0
    %261 = vmatprep.subr.mxu0 0.0
    %262 = vmatpush1.msra.mxu0 0.0
    %263 = vmatprep.subr.mxu0 0.0
    %264 = vmatpush1.msra.mxu0 0.0
    %265 = vmatprep.subr.mxu0 0.0
    %266 = vmatpush1.msra.mxu0 0.0
    %267 = vmatprep.subr.mxu0 0.0
    %268 = vmatpush1.msra.mxu0 0.0
    %269 = vmatprep.subr.mxu0 0.0
    %270 = vmatpush1.msra.mxu0 0.0
    %271 = vmatprep.subr.mxu0 0.0
    %272 = vmatpush1.msra.mxu0 0.0
    %273 = vmatprep.subr.mxu0 0.0
    %274 = vmatpush1.msra.mxu0 0.0
    %275 = vmatprep.subr.mxu0 0.0
    %276 = vmatpush1.msra.mxu0 0.0
    %277 = vmatprep.subr.mxu0 0.0
    %278 = vmatpush1.msra.mxu0 0.0
    %279 = vmatprep.subr.mxu0 0.0
    %280 = vmatpush1.msra.mxu0 0.0
    %281 = vmatprep.subr.mxu0 0.0
    %282 = vmatpush1.msra.mxu0 0.0
    %283 = vmatprep.subr.mxu0 0.0
    %284 = vmatpush1.msra.mxu0 0.0
    %285 = vmatprep.subr.mxu0 0.0
    %286 = vmatpush1.msra.mxu0 0.0
    %287 = vmatprep.subr.mxu0 0.0
    %288 = vmatpush1.msra.mxu0 0.0
    %289 = vmatprep.subr.mxu0 0.0
    %290 = vmatpush1.msra.mxu0 0.0
    %291 = vmatprep.mubr.f32.mxu0 0.0
    %292 = vmatmul.mubr.f32.gmra.mrb[0].mxu0 %v225
    %v293 = vpop.f32.mrb[0].mxu0
    %v294 = vadd.f32 %v222, %v293
    %v295 = vpop.f32.mrb[0].mxu0
    %296 = vdwg.mxu0
    %297 = vst [vmem:[#allocation5] sm:$0xff] %v294
    // Predicated region
    $region34: #{tpu_custom_call.1} parent=1 // pred_check
      _
    $region35: #{tpu_custom_call.1} parent=1 // pred_check_branch
      %299 = sbr.rel (0) target = $region37
    $region36: #{tpu_custom_call.1} parent=1 // pred_region
      %s301 = ssub.s32 128, 128
      %302 = vsyncadd [#allocation4], %s301
      %s304 = sshll.u32 [#allocation5], 4
      %s305 = int_to_ptr.vmem [resolvable:$true] %s304
      %307 = dma.vmem_to_hbm [thread:$0]  %s305, 128, %s7, [#allocation4]
    $region37: #{tpu_custom_call.1} parent=1 // pred_fallthru
      _
    // Predicated region
    $region38: #{tpu_custom_call.1} parent=1 // pred_check
      _
    $region39: #{tpu_custom_call.1} parent=1 // pred_check_branch
      %309 = sbr.rel (0) target = $region41
    $region40: #{tpu_custom_call.1} parent=1 // pred_region
      %310 = dma.done [#allocation4], 128
    $region41: #{tpu_custom_call.1} parent=1 // pred_fallthru
      _
    %311 = vsyncpa [#allocation3], 1
    %312 = vsyncpa [#allocation4], 1

</llo_original>
